<compile_context>
chip_gen: v7x
topology: tpu7x:2x2x1
jax: 0.10.0
libtpu: 0.0.40
codegen_flags: <defaults>
</compile_context>

<pallas_src>
import functools

import jax
import jax.numpy as jnp
from jax.experimental import pallas as pl
from jax.experimental.pallas import tpu as pltpu


def _round_up(x, m):
    return (x + m - 1) // m * m


def _device_kind():
    try:
        return jax.devices()[0].device_kind.lower()
    except Exception:
        return ""


# --------------------------------------------------------------------------- kernel
def _actor_kernel(x_ref, w1_ref, w2_ref, w3_ref, o_ref, xa_ref, *,
                  state_size, bf16_vpu):
    # x_ref : [TB, S]      f32   raw state tile (last dim = full array dim)
    # wN_ref: padded bf16 weights, biases folded into dedicated input rows and
    #         constant-1 "unit" columns forwarding the ones to the next layer.
    # xa_ref: [TB, S_pad]  f32   VMEM scratch for the augmented input.
    S = state_size
    tb = x_ref.shape[0]
    S_pad = xa_ref.shape[1]

    # In-kernel input augmentation: xa = [ state | 1.0 | zeros ].
    # Column S feeds W1's bias row.  Three non-overlapping masked stores (VPU/VMEM
    # work that hides under the matmuls).
    xa_ref[:, :S] = x_ref[...]
    xa_ref[:, S:S + 1] = jnp.ones((tb, 1), xa_ref.dtype)
    if S + 1 < S_pad:
        xa_ref[:, S + 1:] = jnp.zeros((tb, S_pad - S - 1), xa_ref.dtype)
    x_aug = xa_ref[...].astype(jnp.bfloat16)

    # Layer 1: bf16 MXU operands, f32 accumulation.
    h1 = jnp.dot(x_aug, w1_ref[...], preferred_element_type=jnp.float32)
    if bf16_vpu:   # v6e / v7x: bf16-native VPU; identical numerics (round-then-max).
        h1 = jnp.maximum(h1.astype(jnp.bfloat16), 0)
    else:          # v5e: no bf16 VPU; ReLU in f32, single cast for the MXU.
        h1 = jnp.maximum(h1, 0.0).astype(jnp.bfloat16)

    # Layer 2.
    h2 = jnp.dot(h1, w2_ref[...], preferred_element_type=jnp.float32)
    if bf16_vpu:
        h2 = jnp.maximum(h2.astype(jnp.bfloat16), 0)
    else:
        h2 = jnp.maximum(h2, 0.0).astype(jnp.bfloat16)

    # Layer 3 + tanh (EUP), f32 output store (lane-dense, A_pad = 128).
    h3 = jnp.dot(h2, w3_ref[...], preferred_element_type=jnp.float32)
    o_ref[...] = jnp.tanh(h3).astype(o_ref.dtype)


# --------------------------------------------------------------------------- tiling
def _choose_batch_tiling(B, tile_b=None):
    """Pick (TB, B_pad) per TPU generation.
       - 16-row alignment (bf16 LHS minimum tile).
       - v5e: cap 256 (16 MiB scoped VMEM default, slower MXU -> compute already
         covers the per-step overhead).
       - v6e: cap 1024 (per-step MXU work must exceed ~0.35 us pipeline overhead).
       - v7x: even step count >= 2 so the "parallel" grid axis shards cleanly
         across both TensorCores."""
    kind = _device_kind()
    is_v5 = "v5" in kind
    two_cores = "7" in kind
    if tile_b is None:
        tile_b = 256 if is_v5 else 1024
    B16 = _round_up(max(B, 1), 16)
    cap = max(16, _round_up(min(tile_b, B16), 16))
    steps = pl.cdiv(B16, cap)
    if two_cores and B16 >= 32:
        steps = max(steps, 2)
        if steps % 2:
            steps += 1
    TB = _round_up(pl.cdiv(B16, steps), 16)
    return TB, TB * steps


# --------------------------------------------------------------------------- wrapper
def actor_forward(state, packed, *, action_size, tile_b=None):
    """state: [B, state_size] f32.  packed: dict of padded/folded bf16 weights."""
    w1, w2, w3 = packed["w1"], packed["w2"], packed["w3"]
    S_pad, H1p = w1.shape
    H2p = w2.shape[1]
    A_pad = w3.shape[1]
    B, S = state.shape

    TB, B_pad = _choose_batch_tiling(B, tile_b)
    steps = B_pad // TB

    x = state.astype(jnp.float32)
    if B_pad != B:   # cheap row padding only (33 f32 columns), no lane padding in HBM
        x = jnp.concatenate([x, jnp.zeros((B_pad - B, S), jnp.float32)], axis=0)

    flops = 2 * B_pad * (S_pad * H1p + H1p * H2p + H2p * A_pad)
    bytes_accessed = (B_pad * S * 4
                      + (w1.size + w2.size + w3.size) * 2
                      + B_pad * A_pad * 4)
    cost = pl.CostEstimate(flops=flops,
                           transcendentals=B_pad * A_pad,
                           bytes_accessed=bytes_accessed)

    kernel = functools.partial(_actor_kernel, state_size=S,
                               bf16_vpu=("v5" not in _device_kind()))

    out = pl.pallas_call(
        kernel,
        out_shape=jax.ShapeDtypeStruct((B_pad, A_pad), jnp.float32),
        grid=(steps,),
        in_specs=[
            pl.BlockSpec((TB, S), lambda i: (i, 0)),       # raw f32 state tile
            pl.BlockSpec((S_pad, H1p), lambda i: (0, 0)),  # weights VMEM-resident
            pl.BlockSpec((H1p, H2p), lambda i: (0, 0)),
            pl.BlockSpec((H2p, A_pad), lambda i: (0, 0)),
        ],
        out_specs=pl.BlockSpec((TB, A_pad), lambda i: (i, 0)),
        scratch_shapes=[pltpu.VMEM((TB, S_pad), jnp.float32)],
        compiler_params=pltpu.CompilerParams(
            dimension_semantics=("parallel",)),
        cost_estimate=cost,
    )(x, w1, w2, w3)
    return out[:B, :action_size]


# --------------------------------------------------------------------------- params
def init_actor_params(key, state_size, action_size, fc1_units=400, fc2_units=300):
    """Mirror of the PyTorch Actor.reset_parameters():
       - fc1/fc2 weights ~ U(+-1/sqrt(weight.size(0))); PyTorch's size(0) is
         out_features (intentional reproduction of that quirk in hidden_init()).
       - fc3 weights ~ U(-3e-3, 3e-3).
       - biases keep nn.Linear's default U(+-1/sqrt(in_features)).
       Weights stored transposed vs. PyTorch, i.e. shape [in, out]."""
    ks = jax.random.split(key, 6)

    def unif(k, shape, lim):
        return jax.random.uniform(k, shape, jnp.float32, -lim, lim)

    lim1 = 1.0 / float(fc1_units) ** 0.5     # hidden_init(fc1)
    lim2 = 1.0 / float(fc2_units) ** 0.5     # hidden_init(fc2)
    lim3 = 3e-3
    blim1 = 1.0 / float(state_size) ** 0.5
    blim2 = 1.0 / float(fc1_units) ** 0.5
    blim3 = 1.0 / float(fc2_units) ** 0.5
    return {
        "w1": unif(ks[0], (state_size, fc1_units), lim1),
        "b1": unif(ks[1], (fc1_units,), blim1),
        "w2": unif(ks[2], (fc1_units, fc2_units), lim2),
        "b2": unif(ks[3], (fc2_units,), blim2),
        "w3": unif(ks[4], (fc2_units, action_size), lim3),
        "b3": unif(ks[5], (action_size,), blim3),
    }


def pack_actor_params(raw, dtype=jnp.bfloat16):
    """Pad to lane-friendly sizes and fold biases into the weights.
       The fc1 bias lives in row `state_size` of W1 (fed by the in-kernel ones
       column); fc2/fc3 biases live in the last padded input row of W2/W3, fed by
       constant-1 "unit" columns (last padded output column of layers 1 and 2).
       Padding is exact: zero weights, ReLU(0)=0, tanh of padded cols sliced off."""
    w1, b1, w2, b2, w3, b3 = (raw["w1"], raw["b1"], raw["w2"],
                              raw["b2"], raw["w3"], raw["b3"])
    S, H1 = w1.shape
    H2 = w2.shape[1]
    A = w3.shape[1]
    S_pad = _round_up(S + 1, 128)      # 33 -> 128 (room for the ones column)
    H1p = _round_up(H1 + 1, 128)       # 400 -> 512
    H2p = _round_up(H2 + 1, 128)       # 300 -> 384
    A_pad = _round_up(A, 128)          # 4 -> 128 (lane-dense output store)

    W1 = jnp.zeros((S_pad, H1p), jnp.float32)
    W1 = W1.at[:S, :H1].set(w1)
    W1 = W1.at[S, :H1].set(b1)              # bias row, fed by in-kernel ones column
    W1 = W1.at[S, H1p - 1].set(1.0)         # drives h1's constant-1 unit

    W2 = jnp.zeros((H1p, H2p), jnp.float32)
    W2 = W2.at[:H1, :H2].set(w2)
    W2 = W2.at[H1p - 1, :H2].set(b2)
    W2 = W2.at[H1p - 1, H2p - 1].set(1.0)   # drives h2's constant-1 unit

    W3 = jnp.zeros((H2p, A_pad), jnp.float32)
    W3 = W3.at[:H2, :A].set(w3)
    W3 = W3.at[H2p - 1, :A].set(b3)

    return {"w1": W1.astype(dtype), "w2": W2.astype(dtype), "w3": W3.astype(dtype)}


# --------------------------------------------------------------------------- references
def actor_reference(state, raw):
    """Pure-JAX f32 reference (original module semantics)."""
    h1 = jnp.maximum(state @ raw["w1"] + raw["b1"], 0.0)
    h2 = jnp.maximum(h1 @ raw["w2"] + raw["b2"], 0.0)
    return jnp.tanh(h2 @ raw["w3"] + raw["b3"])


def actor_reference_packed(state, packed, *, action_size):
    """Plain-JAX replica of exactly what the kernel computes (same bf16 operands,
       f32 accumulation) — tight numerical check of the kernel itself."""
    w1, w2, w3 = packed["w1"], packed["w2"], packed["w3"]
    B, S = state.shape
    S_pad = w1.shape[0]
    x = jnp.zeros((B, S_pad), jnp.float32).at[:, :S].set(state.astype(jnp.float32))
    x = x.at[:, S].set(1.0).astype(w1.dtype)
    h1 = jnp.maximum(jnp.dot(x, w1, preferred_element_type=jnp.float32), 0.0)
    h2 = jnp.maximum(jnp.dot(h1.astype(w2.dtype), w2,
                             preferred_element_type=jnp.float32), 0.0)
    h3 = jnp.dot(h2.astype(w3.dtype), w3, preferred_element_type=jnp.float32)
    return jnp.tanh(h3)[:, :action_size]


if __name__ == "__main__":
    key = jax.random.PRNGKey(0)
    k_params, k_state, k_state2 = jax.random.split(key, 3)

    state_size, action_size, batch = 33, 4, 8
    raw = init_actor_params(k_params, state_size, action_size)
    packed = pack_actor_params(raw)

    forward = jax.jit(functools.partial(actor_forward, action_size=action_size))

    state = jax.random.normal(k_state, (batch, state_size), jnp.float32)
    out = jax.block_until_ready(forward(state, packed))
    assert out.shape == (batch, action_size)

    # Tight check vs. a plain-JAX replica of the bf16 kernel math.
    ref_bf16 = actor_reference_packed(state, packed, action_size=action_size)
    assert jnp.allclose(out, ref_bf16, atol=1e-3, rtol=1e-3), \
        float(jnp.max(jnp.abs(out - ref_bf16)))

    # Loose check vs. the full-f32 reference (only bf16 rounding of params/inputs differs).
    ref_f32 = actor_reference(state, raw)
    assert jnp.allclose(out, ref_f32, atol=2e-2, rtol=2e-2), \
        float(jnp.max(jnp.abs(out - ref_f32)))

    # Exercise the batch-tiled grid / megacore path with a training-size batch.
    state_big = jax.random.normal(k_state2, (300, state_size), jnp.float32)
    out_big = jax.block_until_ready(forward(state_big, packed))
    assert out_big.shape == (300, action_size)
    assert jnp.allclose(out_big, actor_reference(state_big, raw), atol=2e-2, rtol=2e-2)
    assert jnp.allclose(
        out_big, actor_reference_packed(state_big, packed, action_size=action_size),
        atol=1e-3, rtol=1e-3)

    print("KERNEL_OK")
</pallas_src>

<mosaic_0001>
module attributes {stable_mosaic.version = 11 : i64} {
  func.func @_actor_kernel(%arg0: i32, %arg1: memref<16x33xf32, #tpu.memory_space<vmem>>, %arg2: memref<128x512xbf16, #tpu.memory_space<vmem>>, %arg3: memref<512x384xbf16, #tpu.memory_space<vmem>>, %arg4: memref<384x128xbf16, #tpu.memory_space<vmem>>, %arg5: memref<16x128xf32, #tpu.memory_space<vmem>>, %arg6: memref<16x128xf32, #tpu.memory_space<vmem>>) attributes {dimension_semantics = [#tpu.dimension_semantics<parallel>], iteration_bounds = array<i64: 1>, scalar_prefetch = 0 : i64, scratch_operands = 1 : i64, tpu.core_type = #tpu.core_type<tc>, window_params = [{transform_indices = @transform_0, window_bounds = array<i64: 16, 33>}, {pipeline_mode = #tpu.pipeline_mode<synchronous>, transform_indices = @transform_1, window_bounds = array<i64: 128, 512>}, {pipeline_mode = #tpu.pipeline_mode<synchronous>, transform_indices = @transform_2, window_bounds = array<i64: 512, 384>}, {pipeline_mode = #tpu.pipeline_mode<synchronous>, transform_indices = @transform_3, window_bounds = array<i64: 384, 128>}, {transform_indices = @transform_4, window_bounds = array<i64: 16, 128>}]} {
    %c0 = arith.constant 0 : index
    %c0_0 = arith.constant 0 : index
    %0 = vector.load %arg1[%c0, %c0_0] : memref<16x33xf32, #tpu.memory_space<vmem>>, vector<16x33xf32>
    %c0_1 = arith.constant 0 : index
    %c0_2 = arith.constant 0 : index
    %1 = vector.load %arg6[%c0_1, %c0_2] : memref<16x128xf32, #tpu.memory_space<vmem>>, vector<16x33xf32>
    tpu.vector_store %arg6[%c0_1, %c0_2], %0 {strides = array<i32>} : memref<16x128xf32, #tpu.memory_space<vmem>>, vector<16x33xf32>,
    %cst = arith.constant 1.000000e+00 : f32
    %2 = vector.broadcast %cst : f32 to vector<16x1xf32>
    %c0_3 = arith.constant 0 : index
    %c33 = arith.constant 33 : index
    %3 = vector.load %arg6[%c0_3, %c33] : memref<16x128xf32, #tpu.memory_space<vmem>>, vector<16x1xf32>
    tpu.vector_store %arg6[%c0_3, %c33], %2 {strides = array<i32>} : memref<16x128xf32, #tpu.memory_space<vmem>>, vector<16x1xf32>,
    %cst_4 = arith.constant 0.000000e+00 : f32
    %4 = vector.broadcast %cst_4 : f32 to vector<16x94xf32>
    %c0_5 = arith.constant 0 : index
    %c34 = arith.constant 34 : index
    %5 = vector.load %arg6[%c0_5, %c34] : memref<16x128xf32, #tpu.memory_space<vmem>>, vector<16x94xf32>
    tpu.vector_store %arg6[%c0_5, %c34], %4 {strides = array<i32>} : memref<16x128xf32, #tpu.memory_space<vmem>>, vector<16x94xf32>,
    %c0_6 = arith.constant 0 : index
    %c0_7 = arith.constant 0 : index
    %6 = vector.load %arg6[%c0_6, %c0_7] : memref<16x128xf32, #tpu.memory_space<vmem>>, vector<16x128xf32>
    %7 = arith.truncf %6 : vector<16x128xf32> to vector<16x128xbf16>
    %c0_8 = arith.constant 0 : index
    %c0_9 = arith.constant 0 : index
    %8 = vector.load %arg2[%c0_8, %c0_9] : memref<128x512xbf16, #tpu.memory_space<vmem>>, vector<128x512xbf16>
    %cst_10 = arith.constant dense<0.000000e+00> : vector<16x512xf32>
    %9 = tpu.matmul %7, %8, %cst_10 {dimension_numbers = #tpu.dot_dimension_numbers<[1], [0], [0], [1], [0, 0, 1, 1], [], []>} : vector<16x128xbf16>, vector<128x512xbf16>, vector<16x512xf32> -> vector<16x512xf32>
    %10 = arith.truncf %9 : vector<16x512xf32> to vector<16x512xbf16>
    %cst_11 = arith.constant 0.000000e+00 : bf16
    %11 = vector.broadcast %cst_11 : bf16 to vector<16x512xbf16>
    %12 = arith.maximumf %10, %11 : vector<16x512xbf16>
    %c0_12 = arith.constant 0 : index
    %c0_13 = arith.constant 0 : index
    %13 = vector.load %arg3[%c0_12, %c0_13] : memref<512x384xbf16, #tpu.memory_space<vmem>>, vector<512x384xbf16>
    %cst_14 = arith.constant dense<0.000000e+00> : vector<16x384xf32>
    %14 = tpu.matmul %12, %13, %cst_14 {dimension_numbers = #tpu.dot_dimension_numbers<[1], [0], [0], [1], [0, 0, 1, 1], [], []>} : vector<16x512xbf16>, vector<512x384xbf16>, vector<16x384xf32> -> vector<16x384xf32>
    %15 = arith.truncf %14 : vector<16x384xf32> to vector<16x384xbf16>
    %cst_15 = arith.constant 0.000000e+00 : bf16
    %16 = vector.broadcast %cst_15 : bf16 to vector<16x384xbf16>
    %17 = arith.maximumf %15, %16 : vector<16x384xbf16>
    %c0_16 = arith.constant 0 : index
    %c0_17 = arith.constant 0 : index
    %18 = vector.load %arg4[%c0_16, %c0_17] : memref<384x128xbf16, #tpu.memory_space<vmem>>, vector<384x128xbf16>
    %cst_18 = arith.constant dense<0.000000e+00> : vector<16x128xf32>
    %19 = tpu.matmul %17, %18, %cst_18 {dimension_numbers = #tpu.dot_dimension_numbers<[1], [0], [0], [1], [0, 0, 1, 1], [], []>} : vector<16x384xbf16>, vector<384x128xbf16>, vector<16x128xf32> -> vector<16x128xf32>
    %20 = math.tanh %19 : vector<16x128xf32>
    %c0_19 = arith.constant 0 : index
    %c0_20 = arith.constant 0 : index
    %21 = vector.load %arg5[%c0_19, %c0_20] : memref<16x128xf32, #tpu.memory_space<vmem>>, vector<16x128xf32>
    tpu.vector_store %arg5[%c0_19, %c0_20], %20 {strides = array<i32>} : memref<16x128xf32, #tpu.memory_space<vmem>>, vector<16x128xf32>,
    return
  }
  func.func @transform_0(%arg0: i32) -> (i32, i32) {
    %c0_i32 = arith.constant 0 : i32
    %c0_i32_0 = arith.constant 0 : i32
    return %arg0, %c0_i32 : i32, i32
  }
  func.func @transform_1(%arg0: i32) -> (i32, i32) {
    %c0_i32 = arith.constant 0 : i32
    %c0_i32_0 = arith.constant 0 : i32
    %c0_i32_1 = arith.constant 0 : i32
    return %c0_i32, %c0_i32_0 : i32, i32
  }
  func.func @transform_2(%arg0: i32) -> (i32, i32) {
    %c0_i32 = arith.constant 0 : i32
    %c0_i32_0 = arith.constant 0 : i32
    %c0_i32_1 = arith.constant 0 : i32
    return %c0_i32, %c0_i32_0 : i32, i32
  }
  func.func @transform_3(%arg0: i32) -> (i32, i32) {
    %c0_i32 = arith.constant 0 : i32
    %c0_i32_0 = arith.constant 0 : i32
    %c0_i32_1 = arith.constant 0 : i32
    return %c0_i32, %c0_i32_0 : i32, i32
  }
  func.func @transform_4(%arg0: i32) -> (i32, i32) {
    %c0_i32 = arith.constant 0 : i32
    %c0_i32_0 = arith.constant 0 : i32
    return %arg0, %c0_i32 : i32, i32
  }
}

</mosaic_0001>

<llo_original>
// kernel: actor_forward.1
$region0: #{actor_forward.1}
  #allocation0 [shape = 'u32[]', space=smem, size = 0x4, offset = 0x4, fixed_abs, tag = 'smem constant byte address 0x4 - core index']
  #allocation1 [shape = 'u32[144,128]{1,0:T(1,128)}', space=vmem, size = 0x12000, scoped, tag = 'internal scratch']
  #allocation2 [shape = 'f32[16,128]{1,0:T(8,128)}', space=vmem, size = 0x2000, scoped, tag = 'scratch operand']
  %s0 = inlined_call_operand.vmem [shape: f32[16,33], index: 0, kind: input, shape index: {}]
  %s1 = inlined_call_operand.hbm [shape: bf16[128,512], index: 1, kind: input, shape index: {}]
  %s2 = inlined_call_operand.hbm [shape: bf16[512,384], index: 2, kind: input, shape index: {}]
  %s3 = inlined_call_operand.hbm [shape: bf16[384,128], index: 3, kind: input, shape index: {}]
  %s4 = inlined_call_operand.vmem [shape: f32[16,128], index: 4, kind: output, shape index: {}]
  %s5 = sld [smem:[#allocation0]]
  $region38: #{actor_forward.1} parent=0
    _
  %s7 = ssub.s32 1, %s5
  %s8 = scalar_select 0, %s7, %s5
  $region1: #{actor_forward.1} parent=0
    #allocation3 [shape = 'u8[131072]{0}', space=vmem, size = 0x20000, scoped, tag = 'input window, operand 1, single buffered']
    #allocation4 [shape = 's32[1]{0}', space=sflag, size = 0x4, scoped, tag = 'scoped memory for actor_forward.1']
    #allocation5 [shape = 'u8[393216]{0}', space=vmem, size = 0x60000, scoped, tag = 'input window, operand 2, single buffered']
    #allocation6 [shape = 's32[1]{0}', space=sflag, size = 0x4, scoped, tag = 'scoped memory for actor_forward.1']
    #allocation7 [shape = 'u8[98304]{0}', space=vmem, size = 0x18000, scoped, tag = 'input window, operand 3, single buffered']
    %9 = vsyncpa [#allocation4], 0
    %10 = vsyncpa [#allocation6], 0
    // Predicated region
    $region2: #{actor_forward.1} parent=1 // pred_check
      _
    $region3: #{actor_forward.1} parent=1 // pred_check_branch
      %12 = sbr.rel (0) target = $region5
    $region4: #{actor_forward.1} parent=1 // pred_region
      _
    $region5: #{actor_forward.1} parent=1 // pred_fallthru
      _
    // Predicated region
    $region6: #{actor_forward.1} parent=1 // pred_check
      _
    $region7: #{actor_forward.1} parent=1 // pred_check_branch
      %14 = sbr.rel (0) target = $region9
    $region8: #{actor_forward.1} parent=1 // pred_region
      %s16 = ssub.s32 4096, 4096
      %17 = vsyncadd [#allocation4], %s16
      %s18 = sshll.u32 [#allocation3], 4
      %s19 = int_to_ptr.vmem [resolvable:$true] %s18
      %24 = dma.hbm_to_vmem [thread:$0]  %s1, 4096, %s19, [#allocation4], 256, 256, 16
    $region9: #{actor_forward.1} parent=1 // pred_fallthru
      _
    // Predicated region
    $region10: #{actor_forward.1} parent=1 // pred_check
      _
    $region11: #{actor_forward.1} parent=1 // pred_check_branch
      %26 = sbr.rel (0) target = $region13
    $region12: #{actor_forward.1} parent=1 // pred_region
      %s28 = ssub.s32 12288, 12288
      %29 = vsyncadd [#allocation6], %s28
      %s30 = sshll.u32 [#allocation5], 4
      %s31 = int_to_ptr.vmem [resolvable:$true] %s30
      %36 = dma.hbm_to_vmem [thread:$0]  %s2, 12288, %s31, [#allocation6], 192, 192, 12
    $region13: #{actor_forward.1} parent=1 // pred_fallthru
      _
    // Predicated region
    $region14: #{actor_forward.1} parent=1 // pred_check
      _
    $region15: #{actor_forward.1} parent=1 // pred_check_branch
      %38 = sbr.rel (0) target = $region17
    $region16: #{actor_forward.1} parent=1 // pred_region
      %s40 = ssub.s32 3072, 3072
      %41 = vsyncadd [#allocation6], %s40
      %s42 = sshll.u32 [#allocation7], 4
      %s43 = int_to_ptr.vmem [resolvable:$true] %s42
      %48 = dma.hbm_to_vmem [thread:$0]  %s3, 3072, %s43, [#allocation6], 64, 64, 4
    $region17: #{actor_forward.1} parent=1 // pred_fallthru
      _
    // Predicated region
    $region18: #{actor_forward.1} parent=1 // pred_check
      _
    $region19: #{actor_forward.1} parent=1 // pred_check_branch
      %50 = sbr.rel (0) target = $region21
    $region20: #{actor_forward.1} parent=1 // pred_region
      %51 = dma.done [#allocation4], 4096
    $region21: #{actor_forward.1} parent=1 // pred_fallthru
      _
    // Predicated region
    $region22: #{actor_forward.1} parent=1 // pred_check
      _
    $region23: #{actor_forward.1} parent=1 // pred_check_branch
      %53 = sbr.rel (0) target = $region25
    $region24: #{actor_forward.1} parent=1 // pred_region
      %54 = dma.done [#allocation6], 12288
    $region25: #{actor_forward.1} parent=1 // pred_fallthru
      _
    // Predicated region
    $region26: #{actor_forward.1} parent=1 // pred_check
      _
    $region27: #{actor_forward.1} parent=1 // pred_check_branch
      %56 = sbr.rel (0) target = $region29
    $region28: #{actor_forward.1} parent=1 // pred_region
      %57 = dma.done [#allocation6], 3072
    $region29: #{actor_forward.1} parent=1 // pred_fallthru
      _
    %v59 = vld [vmem:[%s0] sm:$0xff]
    %v60 = vld [vmem:[%s0 + $0x8] sm:$0xff]
    %vm61 = vcmask 269312
    %62 = vst.msk [vmem:[#allocation2] sm:$0xff] %vm61, %v59
    %63 = vst.msk [vmem:[#allocation2 + $0x8] sm:$0xff] %vm61, %v60
    %vm64 = vcmask 277768
    %65 = vst.msk [vmem:[#allocation2] sm:$0xff] %vm64, 1.0
    %66 = vst.msk [vmem:[#allocation2 + $0x8] sm:$0xff] %vm64, 1.0
    %vm67 = vcmask 1047824
    %68 = vst.msk [vmem:[#allocation2] sm:$0xff] %vm67, 0.0
    %69 = vst.msk [vmem:[#allocation2 + $0x8] sm:$0xff] %vm67, 0.0
    %v70 = vld [vmem:[#allocation2] sm:$0xff]
    %v71 = vld [vmem:[#allocation2 + $0x8] sm:$0xff]
    %v72 = vpack.c.bf16 %v71, %v70
    %v73 = vld [vmem:[#allocation3] sm:$0xff]
    %v74 = vld [vmem:[#allocation3 + $0x8] sm:$0xff]
    %v75 = vld [vmem:[#allocation3 + $0x10] sm:$0xff]
    %v76 = vld [vmem:[#allocation3 + $0x18] sm:$0xff]
    %v77 = vld [vmem:[#allocation3 + $0x20] sm:$0xff]
    %v78 = vld [vmem:[#allocation3 + $0x28] sm:$0xff]
    %v79 = vld [vmem:[#allocation3 + $0x30] sm:$0xff]
    %v80 = vld [vmem:[#allocation3 + $0x38] sm:$0xff]
    %v81 = vld [vmem:[#allocation3 + $0x40] sm:$0xff]
    %v82 = vld [vmem:[#allocation3 + $0x48] sm:$0xff]
    %v83 = vld [vmem:[#allocation3 + $0x50] sm:$0xff]
    %v84 = vld [vmem:[#allocation3 + $0x58] sm:$0xff]
    %v85 = vld [vmem:[#allocation3 + $0x60] sm:$0xff]
    %v86 = vld [vmem:[#allocation3 + $0x68] sm:$0xff]
    %v87 = vld [vmem:[#allocation3 + $0x70] sm:$0xff]
    %v88 = vld [vmem:[#allocation3 + $0x78] sm:$0xff]
    %v89 = vld [vmem:[#allocation3 + $0x80] sm:$0xff]
    %v90 = vld [vmem:[#allocation3 + $0x88] sm:$0xff]
    %v91 = vld [vmem:[#allocation3 + $0x90] sm:$0xff]
    %v92 = vld [vmem:[#allocation3 + $0x98] sm:$0xff]
    %v93 = vld [vmem:[#allocation3 + $0xa0] sm:$0xff]
    %v94 = vld [vmem:[#allocation3 + $0xa8] sm:$0xff]
    %v95 = vld [vmem:[#allocation3 + $0xb0] sm:$0xff]
    %v96 = vld [vmem:[#allocation3 + $0xb8] sm:$0xff]
    %v97 = vld [vmem:[#allocation3 + $0xc0] sm:$0xff]
    %v98 = vld [vmem:[#allocation3 + $0xc8] sm:$0xff]
    %v99 = vld [vmem:[#allocation3 + $0xd0] sm:$0xff]
    %v100 = vld [vmem:[#allocation3 + $0xd8] sm:$0xff]
    %v101 = vld [vmem:[#allocation3 + $0xe0] sm:$0xff]
    %v102 = vld [vmem:[#allocation3 + $0xe8] sm:$0xff]
    %v103 = vld [vmem:[#allocation3 + $0xf0] sm:$0xff]
    %v104 = vld [vmem:[#allocation3 + $0xf8] sm:$0xff]
    %v137 = vunpack.c.l.b16 %v73
    %v138 = vunpack.c.h.b16 %v73
    %v139 = vunpack.c.l.b16 %v74
    %v140 = vunpack.c.h.b16 %v74
    %v141 = vunpack.c.l.b16 %v75
    %v142 = vunpack.c.h.b16 %v75
    %v143 = vunpack.c.l.b16 %v76
    %v144 = vunpack.c.h.b16 %v76
    %v145 = vunpack.c.l.b16 %v77
    %v146 = vunpack.c.h.b16 %v77
    %v147 = vunpack.c.l.b16 %v78
    %v148 = vunpack.c.h.b16 %v78
    %v149 = vunpack.c.l.b16 %v79
    %v150 = vunpack.c.h.b16 %v79
    %v151 = vunpack.c.l.b16 %v80
    %v152 = vunpack.c.h.b16 %v80
    %v153 = vunpack.c.l.b16 %v81
    %v154 = vunpack.c.h.b16 %v81
    %v155 = vunpack.c.l.b16 %v82
    %v156 = vunpack.c.h.b16 %v82
    %v157 = vunpack.c.l.b16 %v83
    %v158 = vunpack.c.h.b16 %v83
    %v159 = vunpack.c.l.b16 %v84
    %v160 = vunpack.c.h.b16 %v84
    %v161 = vunpack.c.l.b16 %v85
    %v162 = vunpack.c.h.b16 %v85
    %v163 = vunpack.c.l.b16 %v86
    %v164 = vunpack.c.h.b16 %v86
    %v165 = vunpack.c.l.b16 %v87
    %v166 = vunpack.c.h.b16 %v87
    %v167 = vunpack.c.l.b16 %v88
    %v168 = vunpack.c.h.b16 %v88
    %v169 = vunpack.c.l.b16 %v89
    %v170 = vunpack.c.h.b16 %v89
    %v171 = vunpack.c.l.b16 %v90
    %v172 = vunpack.c.h.b16 %v90
    %v173 = vunpack.c.l.b16 %v91
    %v174 = vunpack.c.h.b16 %v91
    %v175 = vunpack.c.l.b16 %v92
    %v176 = vunpack.c.h.b16 %v92
    %v177 = vunpack.c.l.b16 %v93
    %v178 = vunpack.c.h.b16 %v93
    %v179 = vunpack.c.l.b16 %v94
    %v180 = vunpack.c.h.b16 %v94
    %v181 = vunpack.c.l.b16 %v95
    %v182 = vunpack.c.h.b16 %v95
    %v183 = vunpack.c.l.b16 %v96
    %v184 = vunpack.c.h.b16 %v96
    %v185 = vunpack.c.l.b16 %v97
    %v186 = vunpack.c.h.b16 %v97
    %v187 = vunpack.c.l.b16 %v98
    %v188 = vunpack.c.h.b16 %v98
    %v189 = vunpack.c.l.b16 %v99
    %v190 = vunpack.c.h.b16 %v99
    %v191 = vunpack.c.l.b16 %v100
    %v192 = vunpack.c.h.b16 %v100
    %v193 = vunpack.c.l.b16 %v101
    %v194 = vunpack.c.h.b16 %v101
    %v195 = vunpack.c.l.b16 %v102
    %v196 = vunpack.c.h.b16 %v102
    %v197 = vunpack.c.l.b16 %v103
    %v198 = vunpack.c.h.b16 %v103
    %v199 = vunpack.c.l.b16 %v104
    %v200 = vunpack.c.h.b16 %v104
    %v201 = vpack.c.b16 %v141, %v137
    %v202 = vpack.c.b16 %v142, %v138
    %v203 = vpack.c.b16 %v143, %v139
    %v204 = vpack.c.b16 %v144, %v140
    %v205 = vpack.c.b16 %v149, %v145
    %v206 = vpack.c.b16 %v150, %v146
    %v207 = vpack.c.b16 %v151, %v147
    %v208 = vpack.c.b16 %v152, %v148
    %v209 = vpack.c.b16 %v157, %v153
    %v210 = vpack.c.b16 %v158, %v154
    %v211 = vpack.c.b16 %v159, %v155
    %v212 = vpack.c.b16 %v160, %v156
    %v213 = vpack.c.b16 %v165, %v161
    %v214 = vpack.c.b16 %v166, %v162
    %v215 = vpack.c.b16 %v167, %v163
    %v216 = vpack.c.b16 %v168, %v164
    %v217 = vpack.c.b16 %v173, %v169
    %v218 = vpack.c.b16 %v174, %v170
    %v219 = vpack.c.b16 %v175, %v171
    %v220 = vpack.c.b16 %v176, %v172
    %v221 = vpack.c.b16 %v181, %v177
    %v222 = vpack.c.b16 %v182, %v178
    %v223 = vpack.c.b16 %v183, %v179
    %v224 = vpack.c.b16 %v184, %v180
    %v225 = vpack.c.b16 %v189, %v185
    %v226 = vpack.c.b16 %v190, %v186
    %v227 = vpack.c.b16 %v191, %v187
    %v228 = vpack.c.b16 %v192, %v188
    %v229 = vpack.c.b16 %v197, %v193
    %v230 = vpack.c.b16 %v198, %v194
    %v231 = vpack.c.b16 %v199, %v195
    %v232 = vpack.c.b16 %v200, %v196
    %265 = vmatprep.subr.bf16.mxu0 %v202
    %266 = vmatpush1.bf16.msra.mxu0 %v201
    %267 = vmatprep.subr.bf16.mxu0 %v206
    %268 = vmatpush1.bf16.msra.mxu0 %v205
    %269 = vmatprep.subr.bf16.mxu0 %v210
    %270 = vmatpush1.bf16.msra.mxu0 %v209
    %271 = vmatprep.subr.bf16.mxu0 %v214
    %272 = vmatpush1.bf16.msra.mxu0 %v213
    %273 = vmatprep.subr.bf16.mxu0 %v218
    %274 = vmatpush1.bf16.msra.mxu0 %v217
    %275 = vmatprep.subr.bf16.mxu0 %v222
    %276 = vmatpush1.bf16.msra.mxu0 %v221
    %277 = vmatprep.subr.bf16.mxu0 %v226
    %278 = vmatpush1.bf16.msra.mxu0 %v225
    %279 = vmatprep.subr.bf16.mxu0 %v230
    %280 = vmatpush1.bf16.msra.mxu0 %v229
    %281 = vmatprep.subr.bf16.mxu0 0
    %282 = vmatpush1.bf16.msra.mxu0 0
    %283 = vmatprep.subr.bf16.mxu0 0
    %284 = vmatpush1.bf16.msra.mxu0 0
    %285 = vmatprep.subr.bf16.mxu0 0
    %286 = vmatpush1.bf16.msra.mxu0 0
    %287 = vmatprep.subr.bf16.mxu0 0
    %288 = vmatpush1.bf16.msra.mxu0 0
    %289 = vmatprep.subr.bf16.mxu0 0
    %290 = vmatpush1.bf16.msra.mxu0 0
    %291 = vmatprep.subr.bf16.mxu0 0
    %292 = vmatpush1.bf16.msra.mxu0 0
    %293 = vmatprep.subr.bf16.mxu0 0
    %294 = vmatpush1.bf16.msra.mxu0 0
    %295 = vmatprep.subr.bf16.mxu0 0
    %296 = vmatpush1.bf16.msra.mxu0 0
    %297 = vmatprep.mubr.bf16.mxu0 0
    %298 = vmatmul.mubr.bf16.gmra.mrb[0].mxu0 %v72
    %v299 = vpop.f32.mrb[0].mxu0
    %v300 = vadd.f32 0.0, %v299
    %v301 = vpop.f32.mrb[0].mxu0
    %v302 = vadd.f32 0.0, %v301
    %v303 = vpop.f32.mrb[0].mxu0
    %v304 = vadd.f32 0.0, %v303
    %v305 = vpop.f32.mrb[0].mxu0
    %v306 = vadd.f32 0.0, %v305
    %307 = vdwg.mxu0
    %308 = vmatprep.subr.bf16.mxu0 %v204
    %309 = vmatpush1.bf16.msra.mxu0 %v203
    %310 = vmatprep.subr.bf16.mxu0 %v208
    %311 = vmatpush1.bf16.msra.mxu0 %v207
    %312 = vmatprep.subr.bf16.mxu0 %v212
    %313 = vmatpush1.bf16.msra.mxu0 %v211
    %314 = vmatprep.subr.bf16.mxu0 %v216
    %315 = vmatpush1.bf16.msra.mxu0 %v215
    %316 = vmatprep.subr.bf16.mxu0 %v220
    %317 = vmatpush1.bf16.msra.mxu0 %v219
    %318 = vmatprep.subr.bf16.mxu0 %v224
    %319 = vmatpush1.bf16.msra.mxu0 %v223
    %320 = vmatprep.subr.bf16.mxu0 %v228
    %321 = vmatpush1.bf16.msra.mxu0 %v227
    %322 = vmatprep.subr.bf16.mxu0 %v232
    %323 = vmatpush1.bf16.msra.mxu0 %v231
    %324 = vmatprep.subr.bf16.mxu0 0
    %325 = vmatpush1.bf16.msra.mxu0 0
    %326 = vmatprep.subr.bf16.mxu0 0
    %327 = vmatpush1.bf16.msra.mxu0 0
    %328 = vmatprep.subr.bf16.mxu0 0
    %329 = vmatpush1.bf16.msra.mxu0 0
    %330 = vmatprep.subr.bf16.mxu0 0
    %331 = vmatpush1.bf16.msra.mxu0 0
    %332 = vmatprep.subr.bf16.mxu0 0
    %333 = vmatpush1.bf16.msra.mxu0 0
    %334 = vmatprep.subr.bf16.mxu0 0
    %335 = vmatpush1.bf16.msra.mxu0 0
    %336 = vmatprep.subr.bf16.mxu0 0
    %337 = vmatpush1.bf16.msra.mxu0 0
    %338 = vmatprep.subr.bf16.mxu0 0
    %339 = vmatpush1.bf16.msra.mxu0 0
    %340 = vmatprep.mubr.bf16.mxu0 0
    %341 = vmatmul.mubr.bf16.gmra.mrb[0].mxu0 %v72
    %v342 = vpop.f32.mrb[0].mxu0
    %v343 = vadd.f32 0.0, %v342
    %v344 = vpop.f32.mrb[0].mxu0
    %v345 = vadd.f32 0.0, %v344
    %v346 = vpop.f32.mrb[0].mxu0
    %v347 = vadd.f32 0.0, %v346
    %v348 = vpop.f32.mrb[0].mxu0
    %v349 = vadd.f32 0.0, %v348
    %350 = vdwg.mxu0
    %v351 = vpack.c.bf16 %v304, %v300
    %v352 = vpack.c.bf16 %v306, %v302
    %v353 = vpack.c.bf16 %v347, %v343
    %v354 = vpack.c.bf16 %v349, %v345
    %v355 = vmax.bf16 %v351, 0
    %v356 = vmax.bf16 %v352, 0
    %v357 = vmax.bf16 %v353, 0
    %v358 = vmax.bf16 %v354, 0
    %v359 = vld [vmem:[#allocation5] sm:$0xff]
    %v360 = vld [vmem:[#allocation5 + $0x8] sm:$0xf]
    %v361 = vld [vmem:[#allocation5 + $0xc] sm:$0xff]
    %v362 = vld [vmem:[#allocation5 + $0x14] sm:$0xf]
    %v363 = vld [vmem:[#allocation5 + $0x18] sm:$0xff]
    %v364 = vld [vmem:[#allocation5 + $0x20] sm:$0xf]
    %v365 = vld [vmem:[#allocation5 + $0x24] sm:$0xff]
    %v366 = vld [vmem:[#allocation5 + $0x2c] sm:$0xf]
    %v367 = vld [vmem:[#allocation5 + $0x30] sm:$0xff]
    %v368 = vld [vmem:[#allocation5 + $0x38] sm:$0xf]
    %v369 = vld [vmem:[#allocation5 + $0x3c] sm:$0xff]
    %v370 = vld [vmem:[#allocation5 + $0x44] sm:$0xf]
    %v371 = vld [vmem:[#allocation5 + $0x48] sm:$0xff]
    %v372 = vld [vmem:[#allocation5 + $0x50] sm:$0xf]
    %v373 = vld [vmem:[#allocation5 + $0x54] sm:$0xff]
    %v374 = vld [vmem:[#allocation5 + $0x5c] sm:$0xf]
    %v375 = vld [vmem:[#allocation5 + $0x60] sm:$0xff]
    %v376 = vld [vmem:[#allocation5 + $0x68] sm:$0xf]
    %v377 = vld [vmem:[#allocation5 + $0x6c] sm:$0xff]
    %v378 = vld [vmem:[#allocation5 + $0x74] sm:$0xf]
    %v379 = vld [vmem:[#allocation5 + $0x78] sm:$0xff]
    %v380 = vld [vmem:[#allocation5 + $0x80] sm:$0xf]
    %v381 = vld [vmem:[#allocation5 + $0x84] sm:$0xff]
    %v382 = vld [vmem:[#allocation5 + $0x8c] sm:$0xf]
    %v383 = vld [vmem:[#allocation5 + $0x90] sm:$0xff]
    %v384 = vld [vmem:[#allocation5 + $0x98] sm:$0xf]
    %v385 = vld [vmem:[#allocation5 + $0x9c] sm:$0xff]
    %v386 = vld [vmem:[#allocation5 + $0xa4] sm:$0xf]
    %v387 = vld [vmem:[#allocation5 + $0xa8] sm:$0xff]
    %v388 = vld [vmem:[#allocation5 + $0xb0] sm:$0xf]
    %v389 = vld [vmem:[#allocation5 + $0xb4] sm:$0xff]
    %v390 = vld [vmem:[#allocation5 + $0xbc] sm:$0xf]
    %v391 = vld [vmem:[#allocation5 + $0xc0] sm:$0xff]
    %v392 = vld [vmem:[#allocation5 + $0xc8] sm:$0xf]
    %v393 = vld [vmem:[#allocation5 + $0xcc] sm:$0xff]
    %v394 = vld [vmem:[#allocation5 + $0xd4] sm:$0xf]
    %v395 = vld [vmem:[#allocation5 + $0xd8] sm:$0xff]
    %v396 = vld [vmem:[#allocation5 + $0xe0] sm:$0xf]
    %v397 = vld [vmem:[#allocation5 + $0xe4] sm:$0xff]
    %v398 = vld [vmem:[#allocation5 + $0xec] sm:$0xf]
    %v399 = vld [vmem:[#allocation5 + $0xf0] sm:$0xff]
    %v400 = vld [vmem:[#allocation5 + $0xf8] sm:$0xf]
    %v401 = vld [vmem:[#allocation5 + $0xfc] sm:$0xff]
    %v402 = vld [vmem:[#allocation5 + $0x104] sm:$0xf]
    %v403 = vld [vmem:[#allocation5 + $0x108] sm:$0xff]
    %v404 = vld [vmem:[#allocation5 + $0x110] sm:$0xf]
    %v405 = vld [vmem:[#allocation5 + $0x114] sm:$0xff]
    %v406 = vld [vmem:[#allocation5 + $0x11c] sm:$0xf]
    %v407 = vld [vmem:[#allocation5 + $0x120] sm:$0xff]
    %v408 = vld [vmem:[#allocation5 + $0x128] sm:$0xf]
    %v409 = vld [vmem:[#allocation5 + $0x12c] sm:$0xff]
    %v410 = vld [vmem:[#allocation5 + $0x134] sm:$0xf]
    %v411 = vld [vmem:[#allocation5 + $0x138] sm:$0xff]
    %v412 = vld [vmem:[#allocation5 + $0x140] sm:$0xf]
    %v413 = vld [vmem:[#allocation5 + $0x144] sm:$0xff]
    %v414 = vld [vmem:[#allocation5 + $0x14c] sm:$0xf]
    %v415 = vld [vmem:[#allocation5 + $0x150] sm:$0xff]
    %v416 = vld [vmem:[#allocation5 + $0x158] sm:$0xf]
    %v417 = vld [vmem:[#allocation5 + $0x15c] sm:$0xff]
    %v418 = vld [vmem:[#allocation5 + $0x164] sm:$0xf]
    %v419 = vld [vmem:[#allocation5 + $0x168] sm:$0xff]
    %v420 = vld [vmem:[#allocation5 + $0x170] sm:$0xf]
    %v421 = vld [vmem:[#allocation5 + $0x174] sm:$0xff]
    %v422 = vld [vmem:[#allocation5 + $0x17c] sm:$0xf]
    %v423 = vld [vmem:[#allocation5 + $0x180] sm:$0xff]
    %v424 = vld [vmem:[#allocation5 + $0x188] sm:$0xf]
    %v425 = vld [vmem:[#allocation5 + $0x18c] sm:$0xff]
    %v426 = vld [vmem:[#allocation5 + $0x194] sm:$0xf]
    %v427 = vld [vmem:[#allocation5 + $0x198] sm:$0xff]
    %v428 = vld [vmem:[#allocation5 + $0x1a0] sm:$0xf]
    %v429 = vld [vmem:[#allocation5 + $0x1a4] sm:$0xff]
    %v430 = vld [vmem:[#allocation5 + $0x1ac] sm:$0xf]
    %v431 = vld [vmem:[#allocation5 + $0x1b0] sm:$0xff]
    %v432 = vld [vmem:[#allocation5 + $0x1b8] sm:$0xf]
    %v433 = vld [vmem:[#allocation5 + $0x1bc] sm:$0xff]
    %v434 = vld [vmem:[#allocation5 + $0x1c4] sm:$0xf]
    %v435 = vld [vmem:[#allocation5 + $0x1c8] sm:$0xff]
    %v436 = vld [vmem:[#allocation5 + $0x1d0] sm:$0xf]
    %v437 = vld [vmem:[#allocation5 + $0x1d4] sm:$0xff]
    %v438 = vld [vmem:[#allocation5 + $0x1dc] sm:$0xf]
    %v439 = vld [vmem:[#allocation5 + $0x1e0] sm:$0xff]
    %v440 = vld [vmem:[#allocation5 + $0x1e8] sm:$0xf]
    %v441 = vld [vmem:[#allocation5 + $0x1ec] sm:$0xff]
    %v442 = vld [vmem:[#allocation5 + $0x1f4] sm:$0xf]
    %v443 = vld [vmem:[#allocation5 + $0x1f8] sm:$0xff]
    %v444 = vld [vmem:[#allocation5 + $0x200] sm:$0xf]
    %v445 = vld [vmem:[#allocation5 + $0x204] sm:$0xff]
    %v446 = vld [vmem:[#allocation5 + $0x20c] sm:$0xf]
    %v447 = vld [vmem:[#allocation5 + $0x210] sm:$0xff]
    %v448 = vld [vmem:[#allocation5 + $0x218] sm:$0xf]
    %v449 = vld [vmem:[#allocation5 + $0x21c] sm:$0xff]
    %v450 = vld [vmem:[#allocation5 + $0x224] sm:$0xf]
    %v451 = vld [vmem:[#allocation5 + $0x228] sm:$0xff]
    %v452 = vld [vmem:[#allocation5 + $0x230] sm:$0xf]
    %v453 = vld [vmem:[#allocation5 + $0x234] sm:$0xff]
    %v454 = vld [vmem:[#allocation5 + $0x23c] sm:$0xf]
    %v455 = vld [vmem:[#allocation5 + $0x240] sm:$0xff]
    %v456 = vld [vmem:[#allocation5 + $0x248] sm:$0xf]
    %v457 = vld [vmem:[#allocation5 + $0x24c] sm:$0xff]
    %v458 = vld [vmem:[#allocation5 + $0x254] sm:$0xf]
    %v459 = vld [vmem:[#allocation5 + $0x258] sm:$0xff]
    %v460 = vld [vmem:[#allocation5 + $0x260] sm:$0xf]
    %v461 = vld [vmem:[#allocation5 + $0x264] sm:$0xff]
    %v462 = vld [vmem:[#allocation5 + $0x26c] sm:$0xf]
    %v463 = vld [vmem:[#allocation5 + $0x270] sm:$0xff]
    %v464 = vld [vmem:[#allocation5 + $0x278] sm:$0xf]
    %v465 = vld [vmem:[#allocation5 + $0x27c] sm:$0xff]
    %v466 = vld [vmem:[#allocation5 + $0x284] sm:$0xf]
    %v467 = vld [vmem:[#allocation5 + $0x288] sm:$0xff]
    %v468 = vld [vmem:[#allocation5 + $0x290] sm:$0xf]
    %v469 = vld [vmem:[#allocation5 + $0x294] sm:$0xff]
    %v470 = vld [vmem:[#allocation5 + $0x29c] sm:$0xf]
    %v471 = vld [vmem:[#allocation5 + $0x2a0] sm:$0xff]
    %v472 = vld [vmem:[#allocation5 + $0x2a8] sm:$0xf]
    %v473 = vld [vmem:[#allocation5 + $0x2ac] sm:$0xff]
    %v474 = vld [vmem:[#allocation5 + $0x2b4] sm:$0xf]
    %v475 = vld [vmem:[#allocation5 + $0x2b8] sm:$0xff]
    %v476 = vld [vmem:[#allocation5 + $0x2c0] sm:$0xf]
    %v477 = vld [vmem:[#allocation5 + $0x2c4] sm:$0xff]
    %v478 = vld [vmem:[#allocation5 + $0x2cc] sm:$0xf]
    %v479 = vld [vmem:[#allocation5 + $0x2d0] sm:$0xff]
    %v480 = vld [vmem:[#allocation5 + $0x2d8] sm:$0xf]
    %v481 = vld [vmem:[#allocation5 + $0x2dc] sm:$0xff]
    %v482 = vld [vmem:[#allocation5 + $0x2e4] sm:$0xf]
    %v483 = vld [vmem:[#allocation5 + $0x2e8] sm:$0xff]
    %v484 = vld [vmem:[#allocation5 + $0x2f0] sm:$0xf]
    %v485 = vld [vmem:[#allocation5 + $0x2f4] sm:$0xff]
    %v486 = vld [vmem:[#allocation5 + $0x2fc] sm:$0xf]
    %v615 = vunpack.c.l.b16 %v359
    %v616 = vunpack.c.h.b16 %v359
    %v617 = vunpack.c.l.b16 %v360
    %v618 = vunpack.c.l.b16 %v361
    %v619 = vunpack.c.h.b16 %v361
    %v620 = vunpack.c.l.b16 %v362
    %v621 = vunpack.c.l.b16 %v363
    %v622 = vunpack.c.h.b16 %v363
    %v623 = vunpack.c.l.b16 %v364
    %v624 = vunpack.c.l.b16 %v365
    %v625 = vunpack.c.h.b16 %v365
    %v626 = vunpack.c.l.b16 %v366
    %v627 = vunpack.c.l.b16 %v367
    %v628 = vunpack.c.h.b16 %v367
    %v629 = vunpack.c.l.b16 %v368
    %v630 = vunpack.c.l.b16 %v369
    %v631 = vunpack.c.h.b16 %v369
    %v632 = vunpack.c.l.b16 %v370
    %v633 = vunpack.c.l.b16 %v371
    %v634 = vunpack.c.h.b16 %v371
    %v635 = vunpack.c.l.b16 %v372
    %v636 = vunpack.c.l.b16 %v373
    %v637 = vunpack.c.h.b16 %v373
    %v638 = vunpack.c.l.b16 %v374
    %v639 = vunpack.c.l.b16 %v375
    %v640 = vunpack.c.h.b16 %v375
    %v641 = vunpack.c.l.b16 %v376
    %v642 = vunpack.c.l.b16 %v377
    %v643 = vunpack.c.h.b16 %v377
    %v644 = vunpack.c.l.b16 %v378
    %v645 = vunpack.c.l.b16 %v379
    %v646 = vunpack.c.h.b16 %v379
    %v647 = vunpack.c.l.b16 %v380
    %v648 = vunpack.c.l.b16 %v381
    %v649 = vunpack.c.h.b16 %v381
    %v650 = vunpack.c.l.b16 %v382
    %v651 = vunpack.c.l.b16 %v383
    %v652 = vunpack.c.h.b16 %v383
    %v653 = vunpack.c.l.b16 %v384
    %v654 = vunpack.c.l.b16 %v385
    %v655 = vunpack.c.h.b16 %v385
    %v656 = vunpack.c.l.b16 %v386
    %v657 = vunpack.c.l.b16 %v387
    %v658 = vunpack.c.h.b16 %v387
    %v659 = vunpack.c.l.b16 %v388
    %v660 = vunpack.c.l.b16 %v389
    %v661 = vunpack.c.h.b16 %v389
    %v662 = vunpack.c.l.b16 %v390
    %v663 = vunpack.c.l.b16 %v391
    %v664 = vunpack.c.h.b16 %v391
    %v665 = vunpack.c.l.b16 %v392
    %v666 = vunpack.c.l.b16 %v393
    %v667 = vunpack.c.h.b16 %v393
    %v668 = vunpack.c.l.b16 %v394
    %v669 = vunpack.c.l.b16 %v395
    %v670 = vunpack.c.h.b16 %v395
    %v671 = vunpack.c.l.b16 %v396
    %v672 = vunpack.c.l.b16 %v397
    %v673 = vunpack.c.h.b16 %v397
    %v674 = vunpack.c.l.b16 %v398
    %v675 = vunpack.c.l.b16 %v399
    %v676 = vunpack.c.h.b16 %v399
    %v677 = vunpack.c.l.b16 %v400
    %v678 = vunpack.c.l.b16 %v401
    %v679 = vunpack.c.h.b16 %v401
    %v680 = vunpack.c.l.b16 %v402
    %v681 = vunpack.c.l.b16 %v403
    %v682 = vunpack.c.h.b16 %v403
    %v683 = vunpack.c.l.b16 %v404
    %v684 = vunpack.c.l.b16 %v405
    %v685 = vunpack.c.h.b16 %v405
    %v686 = vunpack.c.l.b16 %v406
    %v687 = vunpack.c.l.b16 %v407
    %v688 = vunpack.c.h.b16 %v407
    %v689 = vunpack.c.l.b16 %v408
    %v690 = vunpack.c.l.b16 %v409
    %v691 = vunpack.c.h.b16 %v409
    %v692 = vunpack.c.l.b16 %v410
    %v693 = vunpack.c.l.b16 %v411
    %v694 = vunpack.c.h.b16 %v411
    %v695 = vunpack.c.l.b16 %v412
    %v696 = vunpack.c.l.b16 %v413
    %v697 = vunpack.c.h.b16 %v413
    %v698 = vunpack.c.l.b16 %v414
    %v699 = vunpack.c.l.b16 %v415
    %v700 = vunpack.c.h.b16 %v415
    %v701 = vunpack.c.l.b16 %v416
    %v702 = vunpack.c.l.b16 %v417
    %v703 = vunpack.c.h.b16 %v417
    %v704 = vunpack.c.l.b16 %v418
    %v705 = vunpack.c.l.b16 %v419
    %v706 = vunpack.c.h.b16 %v419
    %v707 = vunpack.c.l.b16 %v420
    %v708 = vunpack.c.l.b16 %v421
    %v709 = vunpack.c.h.b16 %v421
    %v710 = vunpack.c.l.b16 %v422
    %v711 = vunpack.c.l.b16 %v423
    %v712 = vunpack.c.h.b16 %v423
    %v713 = vunpack.c.l.b16 %v424
    %v714 = vunpack.c.l.b16 %v425
    %v715 = vunpack.c.h.b16 %v425
    %v716 = vunpack.c.l.b16 %v426
    %v717 = vunpack.c.l.b16 %v427
    %v718 = vunpack.c.h.b16 %v427
    %v719 = vunpack.c.l.b16 %v428
    %v720 = vunpack.c.l.b16 %v429
    %v721 = vunpack.c.h.b16 %v429
    %v722 = vunpack.c.l.b16 %v430
    %v723 = vunpack.c.l.b16 %v431
    %v724 = vunpack.c.h.b16 %v431
    %v725 = vunpack.c.l.b16 %v432
    %v726 = vunpack.c.l.b16 %v433
    %v727 = vunpack.c.h.b16 %v433
    %v728 = vunpack.c.l.b16 %v434
    %v729 = vunpack.c.l.b16 %v435
    %v730 = vunpack.c.h.b16 %v435
    %v731 = vunpack.c.l.b16 %v436
    %v732 = vunpack.c.l.b16 %v437
    %v733 = vunpack.c.h.b16 %v437
    %v734 = vunpack.c.l.b16 %v438
    %v735 = vunpack.c.l.b16 %v439
    %v736 = vunpack.c.h.b16 %v439
    %v737 = vunpack.c.l.b16 %v440
    %v738 = vunpack.c.l.b16 %v441
    %v739 = vunpack.c.h.b16 %v441
    %v740 = vunpack.c.l.b16 %v442
    %v741 = vunpack.c.l.b16 %v443
    %v742 = vunpack.c.h.b16 %v443
    %v743 = vunpack.c.l.b16 %v444
    %v744 = vunpack.c.l.b16 %v445
    %v745 = vunpack.c.h.b16 %v445
    %v746 = vunpack.c.l.b16 %v446
    %v747 = vunpack.c.l.b16 %v447
    %v748 = vunpack.c.h.b16 %v447
    %v749 = vunpack.c.l.b16 %v448
    %v750 = vunpack.c.l.b16 %v449
    %v751 = vunpack.c.h.b16 %v449
    %v752 = vunpack.c.l.b16 %v450
    %v753 = vunpack.c.l.b16 %v451
    %v754 = vunpack.c.h.b16 %v451
    %v755 = vunpack.c.l.b16 %v452
    %v756 = vunpack.c.l.b16 %v453
    %v757 = vunpack.c.h.b16 %v453
    %v758 = vunpack.c.l.b16 %v454
    %v759 = vunpack.c.l.b16 %v455
    %v760 = vunpack.c.h.b16 %v455
    %v761 = vunpack.c.l.b16 %v456
    %v762 = vunpack.c.l.b16 %v457
    %v763 = vunpack.c.h.b16 %v457
    %v764 = vunpack.c.l.b16 %v458
    %v765 = vunpack.c.l.b16 %v459
    %v766 = vunpack.c.h.b16 %v459
    %v767 = vunpack.c.l.b16 %v460
    %v768 = vunpack.c.l.b16 %v461
    %v769 = vunpack.c.h.b16 %v461
    %v770 = vunpack.c.l.b16 %v462
    %v771 = vunpack.c.l.b16 %v463
    %v772 = vunpack.c.h.b16 %v463
    %v773 = vunpack.c.l.b16 %v464
    %v774 = vunpack.c.l.b16 %v465
    %v775 = vunpack.c.h.b16 %v465
    %v776 = vunpack.c.l.b16 %v466
    %v777 = vunpack.c.l.b16 %v467
    %v778 = vunpack.c.h.b16 %v467
    %v779 = vunpack.c.l.b16 %v468
    %v780 = vunpack.c.l.b16 %v469
    %v781 = vunpack.c.h.b16 %v469
    %v782 = vunpack.c.l.b16 %v470
    %v783 = vunpack.c.l.b16 %v471
    %v784 = vunpack.c.h.b16 %v471
    %v785 = vunpack.c.l.b16 %v472
    %v786 = vunpack.c.l.b16 %v473
    %v787 = vunpack.c.h.b16 %v473
    %v788 = vunpack.c.l.b16 %v474
    %v789 = vunpack.c.l.b16 %v475
    %v790 = vunpack.c.h.b16 %v475
    %v791 = vunpack.c.l.b16 %v476
    %v792 = vunpack.c.l.b16 %v477
    %v793 = vunpack.c.h.b16 %v477
    %v794 = vunpack.c.l.b16 %v478
    %v795 = vunpack.c.l.b16 %v479
    %v796 = vunpack.c.h.b16 %v479
    %v797 = vunpack.c.l.b16 %v480
    %v798 = vunpack.c.l.b16 %v481
    %v799 = vunpack.c.h.b16 %v481
    %v800 = vunpack.c.l.b16 %v482
    %v801 = vunpack.c.l.b16 %v483
    %v802 = vunpack.c.h.b16 %v483
    %v803 = vunpack.c.l.b16 %v484
    %v804 = vunpack.c.l.b16 %v485
    %v805 = vunpack.c.h.b16 %v485
    %v806 = vunpack.c.l.b16 %v486
    %v807 = vpack.c.b16 %v618, %v615
    %v808 = vpack.c.b16 %v619, %v616
    %v809 = vpack.c.b16 %v620, %v617
    %v810 = vpack.c.b16 %v624, %v621
    %v811 = vpack.c.b16 %v625, %v622
    %v812 = vpack.c.b16 %v626, %v623
    %v813 = vpack.c.b16 %v630, %v627
    %v814 = vpack.c.b16 %v631, %v628
    %v815 = vpack.c.b16 %v632, %v629
    %v816 = vpack.c.b16 %v636, %v633
    %v817 = vpack.c.b16 %v637, %v634
    %v818 = vpack.c.b16 %v638, %v635
    %v819 = vpack.c.b16 %v642, %v639
    %v820 = vpack.c.b16 %v643, %v640
    %v821 = vpack.c.b16 %v644, %v641
    %v822 = vpack.c.b16 %v648, %v645
    %v823 = vpack.c.b16 %v649, %v646
    %v824 = vpack.c.b16 %v650, %v647
    %v825 = vpack.c.b16 %v654, %v651
    %v826 = vpack.c.b16 %v655, %v652
    %v827 = vpack.c.b16 %v656, %v653
    %v828 = vpack.c.b16 %v660, %v657
    %v829 = vpack.c.b16 %v661, %v658
    %v830 = vpack.c.b16 %v662, %v659
    %v831 = vpack.c.b16 %v666, %v663
    %v832 = vpack.c.b16 %v667, %v664
    %v833 = vpack.c.b16 %v668, %v665
    %v834 = vpack.c.b16 %v672, %v669
    %v835 = vpack.c.b16 %v673, %v670
    %v836 = vpack.c.b16 %v674, %v671
    %v837 = vpack.c.b16 %v678, %v675
    %v838 = vpack.c.b16 %v679, %v676
    %v839 = vpack.c.b16 %v680, %v677
    %v840 = vpack.c.b16 %v684, %v681
    %v841 = vpack.c.b16 %v685, %v682
    %v842 = vpack.c.b16 %v686, %v683
    %v843 = vpack.c.b16 %v690, %v687
    %v844 = vpack.c.b16 %v691, %v688
    %v845 = vpack.c.b16 %v692, %v689
    %v846 = vpack.c.b16 %v696, %v693
    %v847 = vpack.c.b16 %v697, %v694
    %v848 = vpack.c.b16 %v698, %v695
    %v849 = vpack.c.b16 %v702, %v699
    %v850 = vpack.c.b16 %v703, %v700
    %v851 = vpack.c.b16 %v704, %v701
    %v852 = vpack.c.b16 %v708, %v705
    %v853 = vpack.c.b16 %v709, %v706
    %v854 = vpack.c.b16 %v710, %v707
    %v855 = vpack.c.b16 %v714, %v711
    %v856 = vpack.c.b16 %v715, %v712
    %v857 = vpack.c.b16 %v716, %v713
    %v858 = vpack.c.b16 %v720, %v717
    %v859 = vpack.c.b16 %v721, %v718
    %v860 = vpack.c.b16 %v722, %v719
    %v861 = vpack.c.b16 %v726, %v723
    %v862 = vpack.c.b16 %v727, %v724
    %v863 = vpack.c.b16 %v728, %v725
    %v864 = vpack.c.b16 %v732, %v729
    %v865 = vpack.c.b16 %v733, %v730
    %v866 = vpack.c.b16 %v734, %v731
    %v867 = vpack.c.b16 %v738, %v735
    %v868 = vpack.c.b16 %v739, %v736
    %v869 = vpack.c.b16 %v740, %v737
    %v870 = vpack.c.b16 %v744, %v741
    %v871 = vpack.c.b16 %v745, %v742
    %v872 = vpack.c.b16 %v746, %v743
    %v873 = vpack.c.b16 %v750, %v747
    %v874 = vpack.c.b16 %v751, %v748
    %v875 = vpack.c.b16 %v752, %v749
    %v876 = vpack.c.b16 %v756, %v753
    %v877 = vpack.c.b16 %v757, %v754
    %v878 = vpack.c.b16 %v758, %v755
    %v879 = vpack.c.b16 %v762, %v759
    %v880 = vpack.c.b16 %v763, %v760
    %v881 = vpack.c.b16 %v764, %v761
    %v882 = vpack.c.b16 %v768, %v765
    %v883 = vpack.c.b16 %v769, %v766
    %v884 = vpack.c.b16 %v770, %v767
    %v885 = vpack.c.b16 %v774, %v771
    %v886 = vpack.c.b16 %v775, %v772
    %v887 = vpack.c.b16 %v776, %v773
    %v888 = vpack.c.b16 %v780, %v777
    %v889 = vpack.c.b16 %v781, %v778
    %v890 = vpack.c.b16 %v782, %v779
    %v891 = vpack.c.b16 %v786, %v783
    %v892 = vpack.c.b16 %v787, %v784
    %v893 = vpack.c.b16 %v788, %v785
    %v894 = vpack.c.b16 %v792, %v789
    %v895 = vpack.c.b16 %v793, %v790
    %v896 = vpack.c.b16 %v794, %v791
    %v897 = vpack.c.b16 %v798, %v795
    %v898 = vpack.c.b16 %v799, %v796
    %v899 = vpack.c.b16 %v800, %v797
    %v900 = vpack.c.b16 %v804, %v801
    %v901 = vpack.c.b16 %v805, %v802
    %v902 = vpack.c.b16 %v806, %v803
    %999 = vmatprep.subr.bf16.mxu0 %v808
    %1000 = vmatpush1.bf16.msra.mxu0 %v807
    %1001 = vmatprep.subr.bf16.mxu0 %v811
    %1002 = vmatpush1.bf16.msra.mxu0 %v810
    %1003 = vmatprep.subr.bf16.mxu0 %v814
    %1004 = vmatpush1.bf16.msra.mxu0 %v813
    %1005 = vmatprep.subr.bf16.mxu0 %v817
    %1006 = vmatpush1.bf16.msra.mxu0 %v816
    %1007 = vmatprep.subr.bf16.mxu0 %v820
    %1008 = vmatpush1.bf16.msra.mxu0 %v819
    %1009 = vmatprep.subr.bf16.mxu0 %v823
    %1010 = vmatpush1.bf16.msra.mxu0 %v822
    %1011 = vmatprep.subr.bf16.mxu0 %v826
    %1012 = vmatpush1.bf16.msra.mxu0 %v825
    %1013 = vmatprep.subr.bf16.mxu0 %v829
    %1014 = vmatpush1.bf16.msra.mxu0 %v828
    %1015 = vmatprep.subr.bf16.mxu0 %v832
    %1016 = vmatpush1.bf16.msra.mxu0 %v831
    %1017 = vmatprep.subr.bf16.mxu0 %v835
    %1018 = vmatpush1.bf16.msra.mxu0 %v834
    %1019 = vmatprep.subr.bf16.mxu0 %v838
    %1020 = vmatpush1.bf16.msra.mxu0 %v837
    %1021 = vmatprep.subr.bf16.mxu0 %v841
    %1022 = vmatpush1.bf16.msra.mxu0 %v840
    %1023 = vmatprep.subr.bf16.mxu0 %v844
    %1024 = vmatpush1.bf16.msra.mxu0 %v843
    %1025 = vmatprep.subr.bf16.mxu0 %v847
    %1026 = vmatpush1.bf16.msra.mxu0 %v846
    %1027 = vmatprep.subr.bf16.mxu0 %v850
    %1028 = vmatpush1.bf16.msra.mxu0 %v849
    %1029 = vmatprep.subr.bf16.mxu0 %v853
    %1030 = vmatpush1.bf16.msra.mxu0 %v852
    %1031 = vmatprep.mubr.bf16.mxu0 %v356
    %1032 = vmatmul.mubr.bf16.gmra.mrb[0].mxu0 %v355
    %v1033 = vpop.f32.mrb[0].mxu0
    %v1034 = vadd.f32 0.0, %v1033
    %v1035 = vpop.f32.mrb[0].mxu0
    %v1036 = vadd.f32 0.0, %v1035
    %v1037 = vpop.f32.mrb[0].mxu0
    %v1038 = vadd.f32 0.0, %v1037
    %v1039 = vpop.f32.mrb[0].mxu0
    %v1040 = vadd.f32 0.0, %v1039
    %1041 = vdwg.mxu0
    %1042 = vmatprep.subr.bf16.mxu0 %v856
    %1043 = vmatpush1.bf16.msra.mxu0 %v855
    %1044 = vmatprep.subr.bf16.mxu0 %v859
    %1045 = vmatpush1.bf16.msra.mxu0 %v858
    %1046 = vmatprep.subr.bf16.mxu0 %v862
    %1047 = vmatpush1.bf16.msra.mxu0 %v861
    %1048 = vmatprep.subr.bf16.mxu0 %v865
    %1049 = vmatpush1.bf16.msra.mxu0 %v864
    %1050 = vmatprep.subr.bf16.mxu0 %v868
    %1051 = vmatpush1.bf16.msra.mxu0 %v867
    %1052 = vmatprep.subr.bf16.mxu0 %v871
    %1053 = vmatpush1.bf16.msra.mxu0 %v870
    %1054 = vmatprep.subr.bf16.mxu0 %v874
    %1055 = vmatpush1.bf16.msra.mxu0 %v873
    %1056 = vmatprep.subr.bf16.mxu0 %v877
    %1057 = vmatpush1.bf16.msra.mxu0 %v876
    %1058 = vmatprep.subr.bf16.mxu0 %v880
    %1059 = vmatpush1.bf16.msra.mxu0 %v879
    %1060 = vmatprep.subr.bf16.mxu0 %v883
    %1061 = vmatpush1.bf16.msra.mxu0 %v882
    %1062 = vmatprep.subr.bf16.mxu0 %v886
    %1063 = vmatpush1.bf16.msra.mxu0 %v885
    %1064 = vmatprep.subr.bf16.mxu0 %v889
    %1065 = vmatpush1.bf16.msra.mxu0 %v888
    %1066 = vmatprep.subr.bf16.mxu0 %v892
    %1067 = vmatpush1.bf16.msra.mxu0 %v891
    %1068 = vmatprep.subr.bf16.mxu0 %v895
    %1069 = vmatpush1.bf16.msra.mxu0 %v894
    %1070 = vmatprep.subr.bf16.mxu0 %v898
    %1071 = vmatpush1.bf16.msra.mxu0 %v897
    %1072 = vmatprep.subr.bf16.mxu0 %v901
    %1073 = vmatpush1.bf16.msra.mxu0 %v900
    %1074 = vmatprep.mubr.bf16.mxu0 %v358
    %1075 = vmatmul.mubr.bf16.gmra.mrb[0].mxu0 %v357
    %v1076 = vpop.f32.mrb[0].mxu0
    %v1077 = vadd.f32 %v1034, %v1076
    %v1078 = vpop.f32.mrb[0].mxu0
    %v1079 = vadd.f32 %v1036, %v1078
    %v1080 = vpop.f32.mrb[0].mxu0
    %v1081 = vadd.f32 %v1038, %v1080
    %v1082 = vpop.f32.mrb[0].mxu0
    %v1083 = vadd.f32 %v1040, %v1082
    %1084 = vdwg.mxu0
    %1085 = vmatprep.subr.bf16.mxu0 0
    %1086 = vmatpush1.bf16.msra.mxu0 %v809
    %1087 = vmatprep.subr.bf16.mxu0 0
    %1088 = vmatpush1.bf16.msra.mxu0 %v812
    %1089 = vmatprep.subr.bf16.mxu0 0
    %1090 = vmatpush1.bf16.msra.mxu0 %v815
    %1091 = vmatprep.subr.bf16.mxu0 0
    %1092 = vmatpush1.bf16.msra.mxu0 %v818
    %1093 = vmatprep.subr.bf16.mxu0 0
    %1094 = vmatpush1.bf16.msra.mxu0 %v821
    %1095 = vmatprep.subr.bf16.mxu0 0
    %1096 = vmatpush1.bf16.msra.mxu0 %v824
    %1097 = vmatprep.subr.bf16.mxu0 0
    %1098 = vmatpush1.bf16.msra.mxu0 %v827
    %1099 = vmatprep.subr.bf16.mxu0 0
    %1100 = vmatpush1.bf16.msra.mxu0 %v830
    %1101 = vmatprep.subr.bf16.mxu0 0
    %1102 = vmatpush1.bf16.msra.mxu0 %v833
    %1103 = vmatprep.subr.bf16.mxu0 0
    %1104 = vmatpush1.bf16.msra.mxu0 %v836
    %1105 = vmatprep.subr.bf16.mxu0 0
    %1106 = vmatpush1.bf16.msra.mxu0 %v839
    %1107 = vmatprep.subr.bf16.mxu0 0
    %1108 = vmatpush1.bf16.msra.mxu0 %v842
    %1109 = vmatprep.subr.bf16.mxu0 0
    %1110 = vmatpush1.bf16.msra.mxu0 %v845
    %1111 = vmatprep.subr.bf16.mxu0 0
    %1112 = vmatpush1.bf16.msra.mxu0 %v848
    %1113 = vmatprep.subr.bf16.mxu0 0
    %1114 = vmatpush1.bf16.msra.mxu0 %v851
    %1115 = vmatprep.subr.bf16.mxu0 0
    %1116 = vmatpush1.bf16.msra.mxu0 %v854
    %1117 = vmatprep.mubr.bf16.mxu0 %v356
    %1118 = vmatmul.mubr.bf16.gmra.mrb[0].mxu0 %v355
    %v1119 = vpop.f32.mrb[0].mxu0
    %v1120 = vadd.f32 0.0, %v1119
    %v1121 = vpop.f32.mrb[0].mxu0
    %v1122 = vpop.f32.mrb[0].mxu0
    %v1123 = vadd.f32 0.0, %v1122
    %v1124 = vpop.f32.mrb[0].mxu0
    %1125 = vdwg.mxu0
    %1126 = vmatprep.subr.bf16.mxu0 0
    %1127 = vmatpush1.bf16.msra.mxu0 %v857
    %1128 = vmatprep.subr.bf16.mxu0 0
    %1129 = vmatpush1.bf16.msra.mxu0 %v860
    %1130 = vmatprep.subr.bf16.mxu0 0
    %1131 = vmatpush1.bf16.msra.mxu0 %v863
    %1132 = vmatprep.subr.bf16.mxu0 0
    %1133 = vmatpush1.bf16.msra.mxu0 %v866
    %1134 = vmatprep.subr.bf16.mxu0 0
    %1135 = vmatpush1.bf16.msra.mxu0 %v869
    %1136 = vmatprep.subr.bf16.mxu0 0
    %1137 = vmatpush1.bf16.msra.mxu0 %v872
    %1138 = vmatprep.subr.bf16.mxu0 0
    %1139 = vmatpush1.bf16.msra.mxu0 %v875
    %1140 = vmatprep.subr.bf16.mxu0 0
    %1141 = vmatpush1.bf16.msra.mxu0 %v878
    %1142 = vmatprep.subr.bf16.mxu0 0
    %1143 = vmatpush1.bf16.msra.mxu0 %v881
    %1144 = vmatprep.subr.bf16.mxu0 0
    %1145 = vmatpush1.bf16.msra.mxu0 %v884
    %1146 = vmatprep.subr.bf16.mxu0 0
    %1147 = vmatpush1.bf16.msra.mxu0 %v887
    %1148 = vmatprep.subr.bf16.mxu0 0
    %1149 = vmatpush1.bf16.msra.mxu0 %v890
    %1150 = vmatprep.subr.bf16.mxu0 0
    %1151 = vmatpush1.bf16.msra.mxu0 %v893
    %1152 = vmatprep.subr.bf16.mxu0 0
    %1153 = vmatpush1.bf16.msra.mxu0 %v896
    %1154 = vmatprep.subr.bf16.mxu0 0
    %1155 = vmatpush1.bf16.msra.mxu0 %v899
    %1156 = vmatprep.subr.bf16.mxu0 0
    %1157 = vmatpush1.bf16.msra.mxu0 %v902
    %1158 = vmatprep.mubr.bf16.mxu0 %v358
    %1159 = vmatmul.mubr.bf16.gmra.mrb[0].mxu0 %v357
    %v1160 = vpop.f32.mrb[0].mxu0
    %v1161 = vadd.f32 %v1120, %v1160
    %v1162 = vpop.f32.mrb[0].mxu0
    %v1163 = vpop.f32.mrb[0].mxu0
    %v1164 = vadd.f32 %v1123, %v1163
    %v1165 = vpop.f32.mrb[0].mxu0
    %1166 = vdwg.mxu0
    %v1167 = vpack.c.bf16 %v1081, %v1077
    %v1168 = vpack.c.bf16 %v1083, %v1079
    %v1169 = vpack.c.bf16 %v1164, %v1161
    %v1170 = vmax.bf16 %v1167, 0
    %v1171 = vmax.bf16 %v1168, 0
    %v1172 = vmax.bf16 %v1169, 0
    %v1173 = vld [vmem:[#allocation7] sm:$0xf]
    %v1174 = vld [vmem:[#allocation7 + $0x4] sm:$0xf]
    %v1175 = vld [vmem:[#allocation7 + $0x8] sm:$0xf]
    %v1176 = vld [vmem:[#allocation7 + $0xc] sm:$0xf]
    %v1177 = vld [vmem:[#allocation7 + $0x10] sm:$0xf]
    %v1178 = vld [vmem:[#allocation7 + $0x14] sm:$0xf]
    %v1179 = vld [vmem:[#allocation7 + $0x18] sm:$0xf]
    %v1180 = vld [vmem:[#allocation7 + $0x1c] sm:$0xf]
    %v1181 = vld [vmem:[#allocation7 + $0x20] sm:$0xf]
    %v1182 = vld [vmem:[#allocation7 + $0x24] sm:$0xf]
    %v1183 = vld [vmem:[#allocation7 + $0x28] sm:$0xf]
    %v1184 = vld [vmem:[#allocation7 + $0x2c] sm:$0xf]
    %v1185 = vld [vmem:[#allocation7 + $0x30] sm:$0xf]
    %v1186 = vld [vmem:[#allocation7 + $0x34] sm:$0xf]
    %v1187 = vld [vmem:[#allocation7 + $0x38] sm:$0xf]
    %v1188 = vld [vmem:[#allocation7 + $0x3c] sm:$0xf]
    %v1189 = vld [vmem:[#allocation7 + $0x40] sm:$0xf]
    %v1190 = vld [vmem:[#allocation7 + $0x44] sm:$0xf]
    %v1191 = vld [vmem:[#allocation7 + $0x48] sm:$0xf]
    %v1192 = vld [vmem:[#allocation7 + $0x4c] sm:$0xf]
    %v1193 = vld [vmem:[#allocation7 + $0x50] sm:$0xf]
    %v1194 = vld [vmem:[#allocation7 + $0x54] sm:$0xf]
    %v1195 = vld [vmem:[#allocation7 + $0x58] sm:$0xf]
    %v1196 = vld [vmem:[#allocation7 + $0x5c] sm:$0xf]
    %v1197 = vld [vmem:[#allocation7 + $0x60] sm:$0xf]
    %v1198 = vld [vmem:[#allocation7 + $0x64] sm:$0xf]
    %v1199 = vld [vmem:[#allocation7 + $0x68] sm:$0xf]
    %v1200 = vld [vmem:[#allocation7 + $0x6c] sm:$0xf]
    %v1201 = vld [vmem:[#allocation7 + $0x70] sm:$0xf]
    %v1202 = vld [vmem:[#allocation7 + $0x74] sm:$0xf]
    %v1203 = vld [vmem:[#allocation7 + $0x78] sm:$0xf]
    %v1204 = vld [vmem:[#allocation7 + $0x7c] sm:$0xf]
    %v1205 = vld [vmem:[#allocation7 + $0x80] sm:$0xf]
    %v1206 = vld [vmem:[#allocation7 + $0x84] sm:$0xf]
    %v1207 = vld [vmem:[#allocation7 + $0x88] sm:$0xf]
    %v1208 = vld [vmem:[#allocation7 + $0x8c] sm:$0xf]
    %v1209 = vld [vmem:[#allocation7 + $0x90] sm:$0xf]
    %v1210 = vld [vmem:[#allocation7 + $0x94] sm:$0xf]
    %v1211 = vld [vmem:[#allocation7 + $0x98] sm:$0xf]
    %v1212 = vld [vmem:[#allocation7 + $0x9c] sm:$0xf]
    %v1213 = vld [vmem:[#allocation7 + $0xa0] sm:$0xf]
    %v1214 = vld [vmem:[#allocation7 + $0xa4] sm:$0xf]
    %v1215 = vld [vmem:[#allocation7 + $0xa8] sm:$0xf]
    %v1216 = vld [vmem:[#allocation7 + $0xac] sm:$0xf]
    %v1217 = vld [vmem:[#allocation7 + $0xb0] sm:$0xf]
    %v1218 = vld [vmem:[#allocation7 + $0xb4] sm:$0xf]
    %v1219 = vld [vmem:[#allocation7 + $0xb8] sm:$0xf]
    %v1220 = vld [vmem:[#allocation7 + $0xbc] sm:$0xf]
    %v1269 = vunpack.c.l.b16 %v1173
    %v1270 = vunpack.c.l.b16 %v1174
    %v1271 = vunpack.c.l.b16 %v1175
    %v1272 = vunpack.c.l.b16 %v1176
    %v1273 = vunpack.c.l.b16 %v1177
    %v1274 = vunpack.c.l.b16 %v1178
    %v1275 = vunpack.c.l.b16 %v1179
    %v1276 = vunpack.c.l.b16 %v1180
    %v1277 = vunpack.c.l.b16 %v1181
    %v1278 = vunpack.c.l.b16 %v1182
    %v1279 = vunpack.c.l.b16 %v1183
    %v1280 = vunpack.c.l.b16 %v1184
    %v1281 = vunpack.c.l.b16 %v1185
    %v1282 = vunpack.c.l.b16 %v1186
    %v1283 = vunpack.c.l.b16 %v1187
    %v1284 = vunpack.c.l.b16 %v1188
    %v1285 = vunpack.c.l.b16 %v1189
    %v1286 = vunpack.c.l.b16 %v1190
    %v1287 = vunpack.c.l.b16 %v1191
    %v1288 = vunpack.c.l.b16 %v1192
    %v1289 = vunpack.c.l.b16 %v1193
    %v1290 = vunpack.c.l.b16 %v1194
    %v1291 = vunpack.c.l.b16 %v1195
    %v1292 = vunpack.c.l.b16 %v1196
    %v1293 = vunpack.c.l.b16 %v1197
    %v1294 = vunpack.c.l.b16 %v1198
    %v1295 = vunpack.c.l.b16 %v1199
    %v1296 = vunpack.c.l.b16 %v1200
    %v1297 = vunpack.c.l.b16 %v1201
    %v1298 = vunpack.c.l.b16 %v1202
    %v1299 = vunpack.c.l.b16 %v1203
    %v1300 = vunpack.c.l.b16 %v1204
    %v1301 = vunpack.c.l.b16 %v1205
    %v1302 = vunpack.c.l.b16 %v1206
    %v1303 = vunpack.c.l.b16 %v1207
    %v1304 = vunpack.c.l.b16 %v1208
    %v1305 = vunpack.c.l.b16 %v1209
    %v1306 = vunpack.c.l.b16 %v1210
    %v1307 = vunpack.c.l.b16 %v1211
    %v1308 = vunpack.c.l.b16 %v1212
    %v1309 = vunpack.c.l.b16 %v1213
    %v1310 = vunpack.c.l.b16 %v1214
    %v1311 = vunpack.c.l.b16 %v1215
    %v1312 = vunpack.c.l.b16 %v1216
    %v1313 = vunpack.c.l.b16 %v1217
    %v1314 = vunpack.c.l.b16 %v1218
    %v1315 = vunpack.c.l.b16 %v1219
    %v1316 = vunpack.c.l.b16 %v1220
    %v1317 = vpack.c.b16 %v1270, %v1269
    %v1318 = vpack.c.b16 %v1272, %v1271
    %v1319 = vpack.c.b16 %v1274, %v1273
    %v1320 = vpack.c.b16 %v1276, %v1275
    %v1321 = vpack.c.b16 %v1278, %v1277
    %v1322 = vpack.c.b16 %v1280, %v1279
    %v1323 = vpack.c.b16 %v1282, %v1281
    %v1324 = vpack.c.b16 %v1284, %v1283
    %v1325 = vpack.c.b16 %v1286, %v1285
    %v1326 = vpack.c.b16 %v1288, %v1287
    %v1327 = vpack.c.b16 %v1290, %v1289
    %v1328 = vpack.c.b16 %v1292, %v1291
    %v1329 = vpack.c.b16 %v1294, %v1293
    %v1330 = vpack.c.b16 %v1296, %v1295
    %v1331 = vpack.c.b16 %v1298, %v1297
    %v1332 = vpack.c.b16 %v1300, %v1299
    %v1333 = vpack.c.b16 %v1302, %v1301
    %v1334 = vpack.c.b16 %v1304, %v1303
    %v1335 = vpack.c.b16 %v1306, %v1305
    %v1336 = vpack.c.b16 %v1308, %v1307
    %v1337 = vpack.c.b16 %v1310, %v1309
    %v1338 = vpack.c.b16 %v1312, %v1311
    %v1339 = vpack.c.b16 %v1314, %v1313
    %v1340 = vpack.c.b16 %v1316, %v1315
    %1365 = vmatprep.subr.bf16.mxu0 0
    %1366 = vmatpush1.bf16.msra.mxu0 %v1317
    %1367 = vmatprep.subr.bf16.mxu0 0
    %1368 = vmatpush1.bf16.msra.mxu0 %v1318
    %1369 = vmatprep.subr.bf16.mxu0 0
    %1370 = vmatpush1.bf16.msra.mxu0 %v1319
    %1371 = vmatprep.subr.bf16.mxu0 0
    %1372 = vmatpush1.bf16.msra.mxu0 %v1320
    %1373 = vmatprep.subr.bf16.mxu0 0
    %1374 = vmatpush1.bf16.msra.mxu0 %v1321
    %1375 = vmatprep.subr.bf16.mxu0 0
    %1376 = vmatpush1.bf16.msra.mxu0 %v1322
    %1377 = vmatprep.subr.bf16.mxu0 0
    %1378 = vmatpush1.bf16.msra.mxu0 %v1323
    %1379 = vmatprep.subr.bf16.mxu0 0
    %1380 = vmatpush1.bf16.msra.mxu0 %v1324
    %1381 = vmatprep.subr.bf16.mxu0 0
    %1382 = vmatpush1.bf16.msra.mxu0 %v1325
    %1383 = vmatprep.subr.bf16.mxu0 0
    %1384 = vmatpush1.bf16.msra.mxu0 %v1326
    %1385 = vmatprep.subr.bf16.mxu0 0
    %1386 = vmatpush1.bf16.msra.mxu0 %v1327
    %1387 = vmatprep.subr.bf16.mxu0 0
    %1388 = vmatpush1.bf16.msra.mxu0 %v1328
    %1389 = vmatprep.subr.bf16.mxu0 0
    %1390 = vmatpush1.bf16.msra.mxu0 %v1329
    %1391 = vmatprep.subr.bf16.mxu0 0
    %1392 = vmatpush1.bf16.msra.mxu0 %v1330
    %1393 = vmatprep.subr.bf16.mxu0 0
    %1394 = vmatpush1.bf16.msra.mxu0 %v1331
    %1395 = vmatprep.subr.bf16.mxu0 0
    %1396 = vmatpush1.bf16.msra.mxu0 %v1332
    %1397 = vmatprep.mubr.bf16.mxu0 %v1171
    %1398 = vmatmul.mubr.bf16.gmra.mrb[0].mxu0 %v1170
    %v1399 = vpop.f32.mrb[0].mxu0
    %v1400 = vadd.f32 0.0, %v1399
    %v1401 = vpop.f32.mrb[0].mxu0
    %v1402 = vpop.f32.mrb[0].mxu0
    %v1403 = vadd.f32 0.0, %v1402
    %v1404 = vpop.f32.mrb[0].mxu0
    %1405 = vdwg.mxu0
    %1406 = vmatprep.subr.bf16.mxu0 0
    %1407 = vmatpush1.bf16.msra.mxu0 %v1333
    %1408 = vmatprep.subr.bf16.mxu0 0
    %1409 = vmatpush1.bf16.msra.mxu0 %v1334
    %1410 = vmatprep.subr.bf16.mxu0 0
    %1411 = vmatpush1.bf16.msra.mxu0 %v1335
    %1412 = vmatprep.subr.bf16.mxu0 0
    %1413 = vmatpush1.bf16.msra.mxu0 %v1336
    %1414 = vmatprep.subr.bf16.mxu0 0
    %1415 = vmatpush1.bf16.msra.mxu0 %v1337
    %1416 = vmatprep.subr.bf16.mxu0 0
    %1417 = vmatpush1.bf16.msra.mxu0 %v1338
    %1418 = vmatprep.subr.bf16.mxu0 0
    %1419 = vmatpush1.bf16.msra.mxu0 %v1339
    %1420 = vmatprep.subr.bf16.mxu0 0
    %1421 = vmatpush1.bf16.msra.mxu0 %v1340
    %1422 = vmatprep.subr.bf16.mxu0 0
    %1423 = vmatpush1.bf16.msra.mxu0 0
    %1424 = vmatprep.subr.bf16.mxu0 0
    %1425 = vmatpush1.bf16.msra.mxu0 0
    %1426 = vmatprep.subr.bf16.mxu0 0
    %1427 = vmatpush1.bf16.msra.mxu0 0
    %1428 = vmatprep.subr.bf16.mxu0 0
    %1429 = vmatpush1.bf16.msra.mxu0 0
    %1430 = vmatprep.subr.bf16.mxu0 0
    %1431 = vmatpush1.bf16.msra.mxu0 0
    %1432 = vmatprep.subr.bf16.mxu0 0
    %1433 = vmatpush1.bf16.msra.mxu0 0
    %1434 = vmatprep.subr.bf16.mxu0 0
    %1435 = vmatpush1.bf16.msra.mxu0 0
    %1436 = vmatprep.subr.bf16.mxu0 0
    %1437 = vmatpush1.bf16.msra.mxu0 0
    %1438 = vmatprep.mubr.bf16.mxu0 0
    %1439 = vmatmul.mubr.bf16.gmra.mrb[0].mxu0 %v1172
    %v1440 = vpop.f32.mrb[0].mxu0
    %v1441 = vadd.f32 %v1400, %v1440
    %v1442 = vpop.f32.mrb[0].mxu0
    %v1443 = vpop.f32.mrb[0].mxu0
    %v1444 = vadd.f32 %v1403, %v1443
    %v1445 = vpop.f32.mrb[0].mxu0
    %1446 = vdwg.mxu0
    %v1447 = vtanh.pop %v1441
    %v1448 = vtanh.pop %v1444
    %1449 = vst [vmem:[%s4] sm:$0xff] %v1447
    %1450 = vst [vmem:[%s4 + $0x8] sm:$0xff] %v1448
    // Predicated region
    $region30: #{actor_forward.1} parent=1 // pred_check
      _
    $region31: #{actor_forward.1} parent=1 // pred_check_branch
      %1452 = sbr.rel (0) target = $region33
    $region32: #{actor_forward.1} parent=1 // pred_region
      _
    $region33: #{actor_forward.1} parent=1 // pred_fallthru
      _
    // Predicated region
    $region34: #{actor_forward.1} parent=1 // pred_check
      _
    $region35: #{actor_forward.1} parent=1 // pred_check_branch
      %1454 = sbr.rel (0) target = $region37
    $region36: #{actor_forward.1} parent=1 // pred_region
      _
    $region37: #{actor_forward.1} parent=1 // pred_fallthru
      _
    %1455 = vsyncpa [#allocation4], 1
    %1456 = vsyncpa [#allocation6], 1

</llo_original>
